<compile_context>
chip_gen: v7x
topology: tpu7x:2x2x1
jax: 0.10.0
libtpu: 0.0.40
codegen_flags: <defaults>
</compile_context>

<pallas_src>
import jax
import jax.numpy as jnp
from jax.experimental import pallas as pl
from jax.experimental.pallas import tpu as pltpu


def _sdpa_kernel(scale_ref, q_ref, k_ref, v_ref, o_ref):
    # scale_ref: (1,) f32 in SMEM (scalar prefetch).
    # q_ref/k_ref/v_ref/o_ref: (1, Hb, S, D) VMEM tiles for the current head block.
    q = q_ref[0]                      # (Hb, S, D)
    k = k_ref[0]                      # (Hb, S, D)
    v = v_ref[0]                      # (Hb, S, D)

    # Fold the scale into q: Hb*S*D multiplies instead of Hb*S*S divides.
    inv_scale = 1.0 / scale_ref[0]
    qs = q * inv_scale

    # scaled_qk = (q / scale) @ k^T, contraction on D, batched over heads.
    # f32 accumulation on the MXU; no explicit transpose of k.
    s = jnp.einsum("hqd,hkd->hqk", qs, k,
                   preferred_element_type=jnp.float32)      # (Hb, S, S)

    # Numerically stable softmax along the last axis.
    s = s - jnp.max(s, axis=-1, keepdims=True)
    p = jnp.exp(s)
    p = p * pl.reciprocal(jnp.sum(p, axis=-1, keepdims=True), approx=True)

    # Dropout with p = 0.0 is the identity.

    # output = dropout_qk @ v  -> (Hb, S, D)
    out = jnp.einsum("hqk,hkd->hqd", p.astype(v.dtype), v,
                     preferred_element_type=jnp.float32)
    o_ref[0] = out.astype(o_ref.dtype)


def _pick_head_block(BH, S, D, itemsize=4):
    """Pick how many heads to batch per grid step."""
    budget = 8 * 1024 * 1024  # conservative per-step VMEM budget (fits all chips)
    cands = []
    for h in range(1, BH + 1):
        if BH % h:
            continue
        # rough per-block footprint: q,k,v,out tiles + f32 scores (2x slack)
        blk = h * (4 * S * D + 2 * S * S) * itemsize
        if blk > budget and h > 1:
            continue
        cands.append(h)

    def key(h):
        return (
            (h * D) % 128 == 0,   # prefer head batches that fill 128-lane vregs
            (BH // h) >= 2,       # keep >=2 parallel grid steps (v7x has 2 TCs)
            h,                    # bigger batches amortize per-step overhead
        )

    return max(cands, key=key)


def sdpa_pallas(q, k, v, scale):
    """q, k, v: (B, H, S, D) arrays; scale: python/array scalar."""
    B, H, S, D = q.shape
    BH = B * H
    Hb = _pick_head_block(BH, S, D, jnp.dtype(q.dtype).itemsize)
    G = BH // Hb

    # Pure reshapes (no data movement): (B, H, S, D) -> (G, Hb, S, D).
    qf = q.reshape(G, Hb, S, D)
    kf = k.reshape(G, Hb, S, D)
    vf = v.reshape(G, Hb, S, D)
    scale_arr = jnp.full((1,), scale, dtype=jnp.float32)

    out = pl.pallas_call(
        _sdpa_kernel,
        out_shape=jax.ShapeDtypeStruct((G, Hb, S, D), q.dtype),
        grid_spec=pltpu.PrefetchScalarGridSpec(
            num_scalar_prefetch=1,           # scale -> SMEM, scalar path
            grid=(G,),
            in_specs=[
                pl.BlockSpec((1, Hb, S, D), lambda g, scale_ref: (g, 0, 0, 0)),  # q
                pl.BlockSpec((1, Hb, S, D), lambda g, scale_ref: (g, 0, 0, 0)),  # k
                pl.BlockSpec((1, Hb, S, D), lambda g, scale_ref: (g, 0, 0, 0)),  # v
            ],
            out_specs=pl.BlockSpec((1, Hb, S, D), lambda g, scale_ref: (g, 0, 0, 0)),
        ),
        compiler_params=pltpu.CompilerParams(
            dimension_semantics=("parallel",),
        ),
    )(scale_arr, qf, kf, vf)

    return out.reshape(B, H, S, D)


def sdpa_ref(q, k, v, scale):
    s = jnp.einsum("bhqd,bhkd->bhqk", q, k) / scale
    p = jax.nn.softmax(s, axis=-1)
    return jnp.einsum("bhqk,bhkd->bhqd", p, v)


if __name__ == "__main__":
    key = jax.random.PRNGKey(0)
    kq, kk, kv = jax.random.split(key, 3)

    B, H, S, D = 2, 4, 8, 32
    q = jax.random.normal(kq, (B, H, S, D), dtype=jnp.float32)
    k = jax.random.normal(kk, (B, H, S, D), dtype=jnp.float32)
    v = jax.random.normal(kv, (B, H, S, D), dtype=jnp.float32)
    scale = float(D) ** 0.5

    out = sdpa_pallas(q, k, v, scale)
    jax.block_until_ready(out)

    ref = sdpa_ref(q, k, v, scale)
    assert out.shape == (B, H, S, D)
    # approx=True reciprocal + scale folding => slightly looser tolerance than 1e-5.
    assert jnp.allclose(out, ref, atol=2e-3, rtol=2e-3), float(
        jnp.max(jnp.abs(out - ref))
    )

    print("KERNEL_OK")
</pallas_src>

<mosaic_0001>
module attributes {stable_mosaic.version = 11 : i64} {
  func.func @_sdpa_kernel(%arg0: i32, %arg1: memref<1xf32, #tpu.memory_space<smem>>, %arg2: memref<1x4x8x32xf32, #tpu.memory_space<vmem>>, %arg3: memref<1x4x8x32xf32, #tpu.memory_space<vmem>>, %arg4: memref<1x4x8x32xf32, #tpu.memory_space<vmem>>, %arg5: memref<1x4x8x32xf32, #tpu.memory_space<vmem>>) attributes {dimension_semantics = [#tpu.dimension_semantics<parallel>], iteration_bounds = array<i64: 2>, scalar_prefetch = 1 : i64, scratch_operands = 0 : i64, tpu.core_type = #tpu.core_type<tc>, window_params = [{transform_indices = @transform_0, window_bounds = array<i64: 1, 4, 8, 32>}, {transform_indices = @transform_1, window_bounds = array<i64: 1, 4, 8, 32>}, {transform_indices = @transform_2, window_bounds = array<i64: 1, 4, 8, 32>}, {transform_indices = @transform_3, window_bounds = array<i64: 1, 4, 8, 32>}]} {
    %c0 = arith.constant 0 : index
    %c0_0 = arith.constant 0 : index
    %c0_1 = arith.constant 0 : index
    %c0_2 = arith.constant 0 : index
    %0 = vector.load %arg2[%c0, %c0_0, %c0_1, %c0_2] : memref<1x4x8x32xf32, #tpu.memory_space<vmem>>, vector<1x4x8x32xf32>
    %1 = vector.shape_cast %0 : vector<1x4x8x32xf32> to vector<4x8x32xf32>
    %c0_3 = arith.constant 0 : index
    %c0_4 = arith.constant 0 : index
    %c0_5 = arith.constant 0 : index
    %c0_6 = arith.constant 0 : index
    %2 = vector.load %arg3[%c0_3, %c0_4, %c0_5, %c0_6] : memref<1x4x8x32xf32, #tpu.memory_space<vmem>>, vector<1x4x8x32xf32>
    %3 = vector.shape_cast %2 : vector<1x4x8x32xf32> to vector<4x8x32xf32>
    %c0_7 = arith.constant 0 : index
    %c0_8 = arith.constant 0 : index
    %c0_9 = arith.constant 0 : index
    %c0_10 = arith.constant 0 : index
    %4 = vector.load %arg4[%c0_7, %c0_8, %c0_9, %c0_10] : memref<1x4x8x32xf32, #tpu.memory_space<vmem>>, vector<1x4x8x32xf32>
    %5 = vector.shape_cast %4 : vector<1x4x8x32xf32> to vector<4x8x32xf32>
    %c0_11 = arith.constant 0 : index
    %6 = memref.load %arg1[%c0_11] : memref<1xf32, #tpu.memory_space<smem>>
    %cst = arith.constant 1.000000e+00 : f32
    %7 = arith.divf %cst, %6 : f32
    %8 = vector.broadcast %7 : f32 to vector<4x8x32xf32>
    %9 = arith.mulf %1, %8 : vector<4x8x32xf32>
    "tpu.trace_start"() <{level = 10 : i32, message = "hqd,hkd->hqk"}> : () -> ()
    %cst_12 = arith.constant dense<0.000000e+00> : vector<4x8x8xf32>
    %10 = tpu.matmul %9, %3, %cst_12 {dimension_numbers = #tpu.dot_dimension_numbers<[2], [2], [1], [1], [0, 0, 0, 1, 1, 1], [0], [0]>} : vector<4x8x32xf32>, vector<4x8x32xf32>, vector<4x8x8xf32> -> vector<4x8x8xf32>
    "tpu.trace_stop"() : () -> ()
    %cst_13 = arith.constant dense<0xFF800000> : vector<4x8xf32>
    %11 = vector.multi_reduction <maximumf>, %10, %cst_13 [2] : vector<4x8x8xf32> to vector<4x8xf32>
    %12 = vector.shape_cast %11 : vector<4x8xf32> to vector<4x8x1xf32>
    %13 = vector.broadcast %12 : vector<4x8x1xf32> to vector<4x8x8xf32>
    %14 = arith.subf %10, %13 : vector<4x8x8xf32>
    %15 = math.exp %14 : vector<4x8x8xf32>
    %cst_14 = arith.constant dense<0.000000e+00> : vector<4x8xf32>
    %16 = vector.multi_reduction <add>, %15, %cst_14 [2] : vector<4x8x8xf32> to vector<4x8xf32>
    %17 = vector.shape_cast %16 : vector<4x8xf32> to vector<4x8x1xf32>
    %18 = tpu.reciprocal %17 {approx = true} : vector<4x8x1xf32> -> vector<4x8x1xf32>
    %19 = vector.broadcast %18 : vector<4x8x1xf32> to vector<4x8x8xf32>
    %20 = arith.mulf %15, %19 : vector<4x8x8xf32>
    "tpu.trace_start"() <{level = 10 : i32, message = "hqk,hkd->hqd"}> : () -> ()
    %cst_15 = arith.constant dense<0.000000e+00> : vector<4x8x32xf32>
    %21 = tpu.matmul %20, %5, %cst_15 {dimension_numbers = #tpu.dot_dimension_numbers<[2], [1], [1], [2], [0, 0, 0, 1, 1, 2], [0], [0]>} : vector<4x8x8xf32>, vector<4x8x32xf32>, vector<4x8x32xf32> -> vector<4x8x32xf32>
    "tpu.trace_stop"() : () -> ()
    %c0_16 = arith.constant 0 : index
    %c0_17 = arith.constant 0 : index
    %c0_18 = arith.constant 0 : index
    %c0_19 = arith.constant 0 : index
    %22 = vector.load %arg5[%c0_16, %c0_17, %c0_18, %c0_19] : memref<1x4x8x32xf32, #tpu.memory_space<vmem>>, vector<1x4x8x32xf32>
    %23 = vector.shape_cast %22 : vector<1x4x8x32xf32> to vector<4x8x32xf32>
    %24 = vector.shape_cast %21 : vector<4x8x32xf32> to vector<1x4x8x32xf32>
    tpu.vector_store %arg5[%c0_16, %c0_17, %c0_18, %c0_19], %24 {strides = array<i32>} : memref<1x4x8x32xf32, #tpu.memory_space<vmem>>, vector<1x4x8x32xf32>,
    return
  }
  func.func @transform_0(%arg0: i32, %arg1: memref<1xf32, #tpu.memory_space<smem>>) -> (i32, i32, i32, i32) {
    %c0_i32 = arith.constant 0 : i32
    %c0_i32_0 = arith.constant 0 : i32
    %c0_i32_1 = arith.constant 0 : i32
    %c0_i32_2 = arith.constant 0 : i32
    return %arg0, %c0_i32, %c0_i32_0, %c0_i32_1 : i32, i32, i32, i32
  }
  func.func @transform_1(%arg0: i32, %arg1: memref<1xf32, #tpu.memory_space<smem>>) -> (i32, i32, i32, i32) {
    %c0_i32 = arith.constant 0 : i32
    %c0_i32_0 = arith.constant 0 : i32
    %c0_i32_1 = arith.constant 0 : i32
    %c0_i32_2 = arith.constant 0 : i32
    return %arg0, %c0_i32, %c0_i32_0, %c0_i32_1 : i32, i32, i32, i32
  }
  func.func @transform_2(%arg0: i32, %arg1: memref<1xf32, #tpu.memory_space<smem>>) -> (i32, i32, i32, i32) {
    %c0_i32 = arith.constant 0 : i32
    %c0_i32_0 = arith.constant 0 : i32
    %c0_i32_1 = arith.constant 0 : i32
    %c0_i32_2 = arith.constant 0 : i32
    return %arg0, %c0_i32, %c0_i32_0, %c0_i32_1 : i32, i32, i32, i32
  }
  func.func @transform_3(%arg0: i32, %arg1: memref<1xf32, #tpu.memory_space<smem>>) -> (i32, i32, i32, i32) {
    %c0_i32 = arith.constant 0 : i32
    %c0_i32_0 = arith.constant 0 : i32
    %c0_i32_1 = arith.constant 0 : i32
    %c0_i32_2 = arith.constant 0 : i32
    return %arg0, %c0_i32, %c0_i32_0, %c0_i32_1 : i32, i32, i32, i32
  }
}

</mosaic_0001>

<llo_original>
// kernel: tpu_custom_call.1
$region0: #{tpu_custom_call.1}
  #allocation0 [shape = 'u32[]', space=smem, size = 0x4, offset = 0x4, fixed_abs, tag = 'smem constant byte address 0x4 - core index']
  #allocation1 [shape = 'u32[144,128]{1,0:T(1,128)}', space=vmem, size = 0x12000, scoped, tag = 'internal scratch']
  #allocation2 [shape = 's32[1]{0}', space=sflag, size = 0x4, scoped, tag = 'scoped memory for tpu_custom_call.1']
  #allocation3 [shape = 'f32[1]{0:T(128)S(6)}', space=smem, size = 0x200, scoped, tag = 'prefetched SMEM operand 0']
  %s0 = inlined_call_operand.<no memory space> [shape: f32[1], index: 0, kind: input, shape index: {}]
  %s1 = inlined_call_operand.hbm [shape: f32[2,4,8,32], index: 1, kind: input, shape index: {}]
  %s2 = inlined_call_operand.hbm [shape: f32[2,4,8,32], index: 2, kind: input, shape index: {}]
  %s3 = inlined_call_operand.hbm [shape: f32[2,4,8,32], index: 3, kind: input, shape index: {}]
  %s4 = inlined_call_operand.hbm [shape: f32[2,4,8,32], index: 4, kind: output, shape index: {}]
  %s5 = sld [smem:[#allocation0]]
  $region57: #{tpu_custom_call.1} parent=0
    _
  %s7 = ssub.s32 1, %s5
  %s8 = scalar_select 0, %s7, %s5
  %9 = sst [smem:[#allocation3]] %s0
  $region1: #{tpu_custom_call.1} parent=0
    #allocation4 [shape = 'u8[32768]{0}', space=vmem, size = 0x8000, scoped, tag = 'input window, operand 1']
    #allocation5 [shape = 's32[2]{0}', space=sflag, size = 0x8, scoped, tag = 'scoped memory for tpu_custom_call.1']
    #allocation6 [shape = 's32[2]{0}', space=sflag, size = 0x8, scoped, tag = 'scoped memory for tpu_custom_call.1']
    #allocation7 [shape = 'u8[32768]{0}', space=vmem, size = 0x8000, scoped, tag = 'input window, operand 2']
    #allocation8 [shape = 's32[2]{0}', space=sflag, size = 0x8, scoped, tag = 'scoped memory for tpu_custom_call.1']
    #allocation9 [shape = 'u8[32768]{0}', space=vmem, size = 0x8000, scoped, tag = 'input window, operand 3']
    #allocation10 [shape = 'u8[32768]{0}', space=vmem, size = 0x8000, scoped, tag = 'output window, operand 0']
    %10 = vsyncpa [#allocation5], 0
    %s11 = scalar_lea.sflag [#allocation5], 1
    %12 = vsyncpa %s11, 0
    %13 = vsyncpa [#allocation8], 0
    %s14 = scalar_lea.sflag [#allocation8], 1
    %15 = vsyncpa %s14, 0
    %16 = vsyncpa [#allocation6], 0
    %s17 = scalar_lea.sflag [#allocation6], 1
    %18 = vsyncpa %s17, 0
    loop: start=0, step=1, limit=4
    $region2: #{tpu_custom_call.1} parent=1 // loop_pre_header
      _
    $region3: #{tpu_custom_call.1} parent=1 // loop_header
      %s20 = sphi 0, %s24
      %p21 = scmp.ge.s32.totalorder %s20, 4
      %s30 = sphi 0, %s32
      %s33 = sphi 0, %s30
      %s34 = sphi 0, %s33
      %s50 = sphi 0, %s34
      %s56 = sphi 0, %s58
      %s59 = sphi 0, %s56
      %s60 = sphi 0, %s59
      %s76 = sphi 0, %s60
      %s82 = sphi 0, %s84
      %s85 = sphi 0, %s82
      %s86 = sphi 0, %s85
      %s102 = sphi 0, %s86
      %s108 = sphi 0, %s110
      %s111 = sphi 0, %s108
      %s112 = sphi 0, %s111
      %s128 = sphi 0, %s112
    $region4: #{tpu_custom_call.1} parent=1 // loop_header_branch
      %23 = sbr.rel (%p21) target = $region8
    $region5: #{tpu_custom_call.1} parent=1 // loop_body
      %s25 = ssub.s32 %s20, 1
      %s26 = ssub.s32 %s20, 2
      %s27 = sadd.s32 %s20, 1
      %s28 = ssub.s32 %s20, %s27
      %p29 = scmp.eq.s32.totalorder %s28, 0
      %s31 = sadd.s32 %s30, 1
      %s32 = scalar_select %p29, %s30, %s31
      %p35 = pneg %p29
      %p36 = scmp.eq.s32.totalorder %s20, 1
      %p37 = por %p35, %p36
      %p38 = scmp.ne.s32.totalorder %s30, %s33
      %p39 = scmp.eq.s32.totalorder %s20, 0
      %p40 = por %p38, %p39
      %p41 = scmp.ne.s32.totalorder %s30, %s33
      %p42 = scmp.eq.s32.totalorder %s25, 1
      %p43 = por %p41, %p42
      %p44 = scmp.ne.s32.totalorder %s33, %s34
      %p45 = scmp.eq.s32.totalorder %s25, 0
      %p46 = por %p44, %p45
      %p47 = scmp.ne.s32.totalorder %s33, %s34
      %p48 = scmp.eq.s32.totalorder %s26, 1
      %p49 = por %p47, %p48
      %p51 = scmp.ne.s32.totalorder %s34, %s50
      %p52 = scmp.eq.s32.totalorder %s26, 0
      %p53 = por %p51, %p52
      %s54 = ssub.s32 %s20, %s27
      %p55 = scmp.eq.s32.totalorder %s54, 0
      %s57 = sadd.s32 %s56, 1
      %s58 = scalar_select %p55, %s56, %s57
      %p61 = pneg %p55
      %p62 = scmp.eq.s32.totalorder %s20, 1
      %p63 = por %p61, %p62
      %p64 = scmp.ne.s32.totalorder %s56, %s59
      %p65 = scmp.eq.s32.totalorder %s20, 0
      %p66 = por %p64, %p65
      %p67 = scmp.ne.s32.totalorder %s56, %s59
      %p68 = scmp.eq.s32.totalorder %s25, 1
      %p69 = por %p67, %p68
      %p70 = scmp.ne.s32.totalorder %s59, %s60
      %p71 = scmp.eq.s32.totalorder %s25, 0
      %p72 = por %p70, %p71
      %p73 = scmp.ne.s32.totalorder %s59, %s60
      %p74 = scmp.eq.s32.totalorder %s26, 1
      %p75 = por %p73, %p74
      %p77 = scmp.ne.s32.totalorder %s60, %s76
      %p78 = scmp.eq.s32.totalorder %s26, 0
      %p79 = por %p77, %p78
      %s80 = ssub.s32 %s20, %s27
      %p81 = scmp.eq.s32.totalorder %s80, 0
      %s83 = sadd.s32 %s82, 1
      %s84 = scalar_select %p81, %s82, %s83
      %p87 = pneg %p81
      %p88 = scmp.eq.s32.totalorder %s20, 1
      %p89 = por %p87, %p88
      %p90 = scmp.ne.s32.totalorder %s82, %s85
      %p91 = scmp.eq.s32.totalorder %s20, 0
      %p92 = por %p90, %p91
      %p93 = scmp.ne.s32.totalorder %s82, %s85
      %p94 = scmp.eq.s32.totalorder %s25, 1
      %p95 = por %p93, %p94
      %p96 = scmp.ne.s32.totalorder %s85, %s86
      %p97 = scmp.eq.s32.totalorder %s25, 0
      %p98 = por %p96, %p97
      %p99 = scmp.ne.s32.totalorder %s85, %s86
      %p100 = scmp.eq.s32.totalorder %s26, 1
      %p101 = por %p99, %p100
      %p103 = scmp.ne.s32.totalorder %s86, %s102
      %p104 = scmp.eq.s32.totalorder %s26, 0
      %p105 = por %p103, %p104
      %s106 = ssub.s32 %s20, %s27
      %p107 = scmp.eq.s32.totalorder %s106, 0
      %s109 = sadd.s32 %s108, 1
      %s110 = scalar_select %p107, %s108, %s109
      %p113 = pneg %p107
      %p114 = scmp.eq.s32.totalorder %s20, 1
      %p115 = por %p113, %p114
      %p116 = scmp.ne.s32.totalorder %s108, %s111
      %p117 = scmp.eq.s32.totalorder %s20, 0
      %p118 = por %p116, %p117
      %p119 = scmp.ne.s32.totalorder %s108, %s111
      %p120 = scmp.eq.s32.totalorder %s25, 1
      %p121 = por %p119, %p120
      %p122 = scmp.ne.s32.totalorder %s111, %s112
      %p123 = scmp.eq.s32.totalorder %s25, 0
      %p124 = por %p122, %p123
      %p125 = scmp.ne.s32.totalorder %s111, %s112
      %p126 = scmp.eq.s32.totalorder %s26, 1
      %p127 = por %p125, %p126
      %p129 = scmp.ne.s32.totalorder %s112, %s128
      %p130 = scmp.eq.s32.totalorder %s26, 0
      %p131 = por %p129, %p130
      %p132 = scmp.le.s32.totalorder 1, %s20
      %p133 = scmp.lt.s32.totalorder %s20, 3
      %p134 = pnand %p132, %p133
      %p135 = pneg %p134
      // Predicated region
      $region9: #{tpu_custom_call.1} parent=5 // pred_check
        _
      $region10: #{tpu_custom_call.1} parent=5 // pred_check_branch
        %137 = sbr.rel (%p134) target = $region12
      $region11: #{tpu_custom_call.1} parent=5 // pred_region
        %s138 = ssub.s32 %s20, 1
      $region12: #{tpu_custom_call.1} parent=5 // pred_fallthru
        _
      %p139 = scmp.lt.s32.totalorder %s20, 2
      // Predicated region
      $region13: #{tpu_custom_call.1} parent=5 // pred_check
        %p140 = pneg %p139
      $region14: #{tpu_custom_call.1} parent=5 // pred_check_branch
        %142 = sbr.rel (%p140) target = $region16
      $region15: #{tpu_custom_call.1} parent=5 // pred_region
        // Predicated region
        $region17: #{tpu_custom_call.1} parent=15 // pred_check
          %p143 = pneg %p40
        $region18: #{tpu_custom_call.1} parent=15 // pred_check_branch
          %145 = sbr.rel (%p143) target = $region20
        $region19: #{tpu_custom_call.1} parent=15 // pred_region
          %s146 = sand.u32 %s30, 1
          %s147 = scalar_lea.sflag [#allocation5], %s146
          %s148 = sand.u32 %s30, 1
          %s149 = smul.addr %s148, 32
          %s150 = scalar_lea.vmem [#allocation4], %s149
          %s152 = ssub.s32 512, 512
          %153 = vsyncadd %s147, %s152
          %s154 = smul.addr %s20, 4
          %s155 = smul.addr %s154, 128
          %s156 = scalar_lea.hbm %s1, %s155
          %s157 = sshll.u32 %s150, 4
          %s158 = int_to_ptr.vmem [resolvable:$true] %s157
          %163 = dma.hbm_to_vmem [thread:$0]  %s156, 512, %s158, %s147, 128, 128, 8
        $region20: #{tpu_custom_call.1} parent=15 // pred_fallthru
          _
        // Predicated region
        $region21: #{tpu_custom_call.1} parent=15 // pred_check
          %p164 = pneg %p66
        $region22: #{tpu_custom_call.1} parent=15 // pred_check_branch
          %166 = sbr.rel (%p164) target = $region24
        $region23: #{tpu_custom_call.1} parent=15 // pred_region
          %s167 = sand.u32 %s20, 1
          %s168 = scalar_lea.sflag [#allocation8], %s167
          %s169 = sand.u32 %s56, 1
          %s170 = smul.addr %s169, 32
          %s171 = scalar_lea.vmem [#allocation7], %s170
          %s173 = ssub.s32 512, 512
          %174 = vsyncadd %s168, %s173
          %s175 = smul.addr %s20, 4
          %s176 = smul.addr %s175, 128
          %s177 = scalar_lea.hbm %s2, %s176
          %s178 = sshll.u32 %s171, 4
          %s179 = int_to_ptr.vmem [resolvable:$true] %s178
          %184 = dma.hbm_to_vmem [thread:$0]  %s177, 512, %s179, %s168, 128, 128, 8
        $region24: #{tpu_custom_call.1} parent=15 // pred_fallthru
          _
        // Predicated region
        $region25: #{tpu_custom_call.1} parent=15 // pred_check
          %p185 = pneg %p92
        $region26: #{tpu_custom_call.1} parent=15 // pred_check_branch
          %187 = sbr.rel (%p185) target = $region28
        $region27: #{tpu_custom_call.1} parent=15 // pred_region
          %s188 = sand.u32 %s20, 1
          %s189 = scalar_lea.sflag [#allocation8], %s188
          %s190 = sand.u32 %s82, 1
          %s191 = smul.addr %s190, 32
          %s192 = scalar_lea.vmem [#allocation9], %s191
          %s194 = ssub.s32 512, 512
          %195 = vsyncadd %s189, %s194
          %s196 = smul.addr %s20, 4
          %s197 = smul.addr %s196, 128
          %s198 = scalar_lea.hbm %s3, %s197
          %s199 = sshll.u32 %s192, 4
          %s200 = int_to_ptr.vmem [resolvable:$true] %s199
          %205 = dma.hbm_to_vmem [thread:$0]  %s198, 512, %s200, %s189, 128, 128, 8
        $region28: #{tpu_custom_call.1} parent=15 // pred_fallthru
          _
      $region16: #{tpu_custom_call.1} parent=5 // pred_fallthru
        _
      %p206 = scmp.le.s32.totalorder 1, %s20
      %p207 = scmp.lt.s32.totalorder %s20, 3
      %p208 = pnand %p206, %p207
      %p209 = pneg %p208
      // Predicated region
      $region29: #{tpu_custom_call.1} parent=5 // pred_check
        _
      $region30: #{tpu_custom_call.1} parent=5 // pred_check_branch
        %211 = sbr.rel (%p208) target = $region32
      $region31: #{tpu_custom_call.1} parent=5 // pred_region
        %s212 = ssub.s32 %s20, 1
        %s213 = sand.u32 %s33, 1
        %s214 = scalar_lea.sflag [#allocation5], %s213
        %s215 = sand.u32 %s33, 1
        %s216 = smul.addr %s215, 32
        %s217 = scalar_lea.vmem [#allocation4], %s216
        // Predicated region
        $region33: #{tpu_custom_call.1} parent=31 // pred_check
          %p218 = pneg %p46
        $region34: #{tpu_custom_call.1} parent=31 // pred_check_branch
          %220 = sbr.rel (%p218) target = $region36
        $region35: #{tpu_custom_call.1} parent=31 // pred_region
          %221 = dma.done %s214, 512
        $region36: #{tpu_custom_call.1} parent=31 // pred_fallthru
          _
        %s222 = sand.u32 %s25, 1
        %s223 = scalar_lea.sflag [#allocation8], %s222
        %s224 = sand.u32 %s59, 1
        %s225 = smul.addr %s224, 32
        %s226 = scalar_lea.vmem [#allocation7], %s225
        // Predicated region
        $region37: #{tpu_custom_call.1} parent=31 // pred_check
          %p227 = pneg %p72
        $region38: #{tpu_custom_call.1} parent=31 // pred_check_branch
          %229 = sbr.rel (%p227) target = $region40
        $region39: #{tpu_custom_call.1} parent=31 // pred_region
          %230 = dma.done %s223, 512
        $region40: #{tpu_custom_call.1} parent=31 // pred_fallthru
          _
        %s231 = sand.u32 %s25, 1
        %s232 = scalar_lea.sflag [#allocation8], %s231
        %s233 = sand.u32 %s85, 1
        %s234 = smul.addr %s233, 32
        %s235 = scalar_lea.vmem [#allocation9], %s234
        // Predicated region
        $region41: #{tpu_custom_call.1} parent=31 // pred_check
          %p236 = pneg %p98
        $region42: #{tpu_custom_call.1} parent=31 // pred_check_branch
          %238 = sbr.rel (%p236) target = $region44
        $region43: #{tpu_custom_call.1} parent=31 // pred_region
          %239 = dma.done %s232, 512
        $region44: #{tpu_custom_call.1} parent=31 // pred_fallthru
          _
        %s240 = sand.u32 %s33, 1
        %s241 = scalar_lea.sflag [#allocation5], %s240
        %s242 = sand.u32 %s33, 1
        %s243 = smul.addr %s242, 32
        %s244 = scalar_lea.vmem [#allocation4], %s243
        %p245 = pneg %p46
        %p246 = pneg %p43
        %s247 = sand.u32 %s25, 1
        %s248 = scalar_lea.sflag [#allocation8], %s247
        %s249 = sand.u32 %s59, 1
        %s250 = smul.addr %s249, 32
        %s251 = scalar_lea.vmem [#allocation7], %s250
        %p252 = pneg %p72
        %p253 = pneg %p69
        %s254 = sand.u32 %s25, 1
        %s255 = scalar_lea.sflag [#allocation8], %s254
        %s256 = sand.u32 %s85, 1
        %s257 = smul.addr %s256, 32
        %s258 = scalar_lea.vmem [#allocation9], %s257
        %p259 = pneg %p98
        %p260 = pneg %p95
        %p261 = pneg %p124
        %p262 = pneg %p121
        %s263 = sand.u32 %s111, 1
        %s264 = scalar_lea.sflag [#allocation6], %s263
        %s265 = sand.u32 %s111, 1
        %s266 = smul.addr %s265, 32
        %s267 = scalar_lea.vmem [#allocation10], %s266
        %v268 = vld [vmem:[%s217] sm:$0xff]
        %v269 = vld [vmem:[%s217 + $0x8] sm:$0xff]
        %v270 = vld [vmem:[%s217 + $0x10] sm:$0xff]
        %v271 = vld [vmem:[%s217 + $0x18] sm:$0xff]
        %v272 = vld [vmem:[%s226] sm:$0xff]
        %v273 = vld [vmem:[%s226 + $0x8] sm:$0xff]
        %v274 = vld [vmem:[%s226 + $0x10] sm:$0xff]
        %v275 = vld [vmem:[%s226 + $0x18] sm:$0xff]
        %v276 = vld [vmem:[%s235] sm:$0xff]
        %v277 = vld [vmem:[%s235 + $0x8] sm:$0xff]
        %v278 = vld [vmem:[%s235 + $0x10] sm:$0xff]
        %v279 = vld [vmem:[%s235 + $0x18] sm:$0xff]
        %s280 = sld [smem:[#allocation3]]
        %v281 = vstv %s280
        %v282 = vrcp.pop %v281
        %s283 = vtos %v282
        %v284 = vstv %s283
        %v285 = vmul.f32 %v268, %v284
        %v286 = vmul.f32 %v269, %v284
        %v287 = vmul.f32 %v270, %v284
        %v288 = vmul.f32 %v271, %v284
        %vm289 = vcmask 261120
        %v291 = vsel %vm289, %v285, 0
        %v294 = vsel %vm289, %v272, 0
        %296 = vmatprep.subr.mxu0 0.0
        %297 = vmatpush1.xpose.msra.mxu0 %v294
        %298 = vmatprep.subr.mxu0 0.0
        %299 = vmatpush1.xpose.msra.mxu0 0.0
        %300 = vmatprep.subr.mxu0 0.0
        %301 = vmatpush1.xpose.msra.mxu0 0.0
        %302 = vmatprep.subr.mxu0 0.0
        %303 = vmatpush1.xpose.msra.mxu0 0.0
        %304 = vmatprep.subr.mxu0 0.0
        %305 = vmatpush1.xpose.msra.mxu0 0.0
        %306 = vmatprep.subr.mxu0 0.0
        %307 = vmatpush1.xpose.msra.mxu0 0.0
        %308 = vmatprep.subr.mxu0 0.0
        %309 = vmatpush1.xpose.msra.mxu0 0.0
        %310 = vmatprep.subr.mxu0 0.0
        %311 = vmatpush1.xpose.msra.mxu0 0.0
        %312 = vmatprep.subr.mxu0 0.0
        %313 = vmatpush1.xpose.msra.mxu0 0.0
        %314 = vmatprep.subr.mxu0 0.0
        %315 = vmatpush1.xpose.msra.mxu0 0.0
        %316 = vmatprep.subr.mxu0 0.0
        %317 = vmatpush1.xpose.msra.mxu0 0.0
        %318 = vmatprep.subr.mxu0 0.0
        %319 = vmatpush1.xpose.msra.mxu0 0.0
        %320 = vmatprep.subr.mxu0 0.0
        %321 = vmatpush1.xpose.msra.mxu0 0.0
        %322 = vmatprep.subr.mxu0 0.0
        %323 = vmatpush1.xpose.msra.mxu0 0.0
        %324 = vmatprep.subr.mxu0 0.0
        %325 = vmatpush1.xpose.msra.mxu0 0.0
        %326 = vmatprep.subr.mxu0 0.0
        %327 = vmatpush1.xpose.msra.mxu0 0.0
        %328 = vmatprep.subr.mxu0 0.0
        %329 = vmatpush1.xpose.msra.mxu0 0.0
        %330 = vmatprep.subr.mxu0 0.0
        %331 = vmatpush1.xpose.msra.mxu0 0.0
        %332 = vmatprep.subr.mxu0 0.0
        %333 = vmatpush1.xpose.msra.mxu0 0.0
        %334 = vmatprep.subr.mxu0 0.0
        %335 = vmatpush1.xpose.msra.mxu0 0.0
        %336 = vmatprep.subr.mxu0 0.0
        %337 = vmatpush1.xpose.msra.mxu0 0.0
        %338 = vmatprep.subr.mxu0 0.0
        %339 = vmatpush1.xpose.msra.mxu0 0.0
        %340 = vmatprep.subr.mxu0 0.0
        %341 = vmatpush1.xpose.msra.mxu0 0.0
        %342 = vmatprep.subr.mxu0 0.0
        %343 = vmatpush1.xpose.msra.mxu0 0.0
        %344 = vmatprep.subr.mxu0 0.0
        %345 = vmatpush1.xpose.msra.mxu0 0.0
        %346 = vmatprep.subr.mxu0 0.0
        %347 = vmatpush1.xpose.msra.mxu0 0.0
        %348 = vmatprep.subr.mxu0 0.0
        %349 = vmatpush1.xpose.msra.mxu0 0.0
        %350 = vmatprep.subr.mxu0 0.0
        %351 = vmatpush1.xpose.msra.mxu0 0.0
        %352 = vmatprep.subr.mxu0 0.0
        %353 = vmatpush1.xpose.msra.mxu0 0.0
        %354 = vmatprep.subr.mxu0 0.0
        %355 = vmatpush1.xpose.msra.mxu0 0.0
        %356 = vmatprep.subr.mxu0 0.0
        %357 = vmatpush1.xpose.msra.mxu0 0.0
        %358 = vmatprep.subr.mxu0 0.0
        %359 = vmatpush1.xpose.msra.mxu0 0.0
        %360 = vmatprep.mubr.f32.mxu0 0.0
        %361 = vmatmul.mubr.f32.gmra.mrb[0].mxu0 %v291
        %v362 = vpop.f32.mrb[0].mxu0
        %v363 = vadd.f32 0.0, %v362
        %v364 = vpop.f32.mrb[0].mxu0
        %365 = vdwg.mxu0
        %v367 = vsel %vm289, %v286, 0
        %v370 = vsel %vm289, %v273, 0
        %372 = vmatprep.subr.mxu0 0.0
        %373 = vmatpush1.xpose.msra.mxu0 %v370
        %374 = vmatprep.subr.mxu0 0.0
        %375 = vmatpush1.xpose.msra.mxu0 0.0
        %376 = vmatprep.subr.mxu0 0.0
        %377 = vmatpush1.xpose.msra.mxu0 0.0
        %378 = vmatprep.subr.mxu0 0.0
        %379 = vmatpush1.xpose.msra.mxu0 0.0
        %380 = vmatprep.subr.mxu0 0.0
        %381 = vmatpush1.xpose.msra.mxu0 0.0
        %382 = vmatprep.subr.mxu0 0.0
        %383 = vmatpush1.xpose.msra.mxu0 0.0
        %384 = vmatprep.subr.mxu0 0.0
        %385 = vmatpush1.xpose.msra.mxu0 0.0
        %386 = vmatprep.subr.mxu0 0.0
        %387 = vmatpush1.xpose.msra.mxu0 0.0
        %388 = vmatprep.subr.mxu0 0.0
        %389 = vmatpush1.xpose.msra.mxu0 0.0
        %390 = vmatprep.subr.mxu0 0.0
        %391 = vmatpush1.xpose.msra.mxu0 0.0
        %392 = vmatprep.subr.mxu0 0.0
        %393 = vmatpush1.xpose.msra.mxu0 0.0
        %394 = vmatprep.subr.mxu0 0.0
        %395 = vmatpush1.xpose.msra.mxu0 0.0
        %396 = vmatprep.subr.mxu0 0.0
        %397 = vmatpush1.xpose.msra.mxu0 0.0
        %398 = vmatprep.subr.mxu0 0.0
        %399 = vmatpush1.xpose.msra.mxu0 0.0
        %400 = vmatprep.subr.mxu0 0.0
        %401 = vmatpush1.xpose.msra.mxu0 0.0
        %402 = vmatprep.subr.mxu0 0.0
        %403 = vmatpush1.xpose.msra.mxu0 0.0
        %404 = vmatprep.subr.mxu0 0.0
        %405 = vmatpush1.xpose.msra.mxu0 0.0
        %406 = vmatprep.subr.mxu0 0.0
        %407 = vmatpush1.xpose.msra.mxu0 0.0
        %408 = vmatprep.subr.mxu0 0.0
        %409 = vmatpush1.xpose.msra.mxu0 0.0
        %410 = vmatprep.subr.mxu0 0.0
        %411 = vmatpush1.xpose.msra.mxu0 0.0
        %412 = vmatprep.subr.mxu0 0.0
        %413 = vmatpush1.xpose.msra.mxu0 0.0
        %414 = vmatprep.subr.mxu0 0.0
        %415 = vmatpush1.xpose.msra.mxu0 0.0
        %416 = vmatprep.subr.mxu0 0.0
        %417 = vmatpush1.xpose.msra.mxu0 0.0
        %418 = vmatprep.subr.mxu0 0.0
        %419 = vmatpush1.xpose.msra.mxu0 0.0
        %420 = vmatprep.subr.mxu0 0.0
        %421 = vmatpush1.xpose.msra.mxu0 0.0
        %422 = vmatprep.subr.mxu0 0.0
        %423 = vmatpush1.xpose.msra.mxu0 0.0
        %424 = vmatprep.subr.mxu0 0.0
        %425 = vmatpush1.xpose.msra.mxu0 0.0
        %426 = vmatprep.subr.mxu0 0.0
        %427 = vmatpush1.xpose.msra.mxu0 0.0
        %428 = vmatprep.subr.mxu0 0.0
        %429 = vmatpush1.xpose.msra.mxu0 0.0
        %430 = vmatprep.subr.mxu0 0.0
        %431 = vmatpush1.xpose.msra.mxu0 0.0
        %432 = vmatprep.subr.mxu0 0.0
        %433 = vmatpush1.xpose.msra.mxu0 0.0
        %434 = vmatprep.subr.mxu0 0.0
        %435 = vmatpush1.xpose.msra.mxu0 0.0
        %436 = vmatprep.mubr.f32.mxu0 0.0
        %437 = vmatmul.mubr.f32.gmra.mrb[0].mxu0 %v367
        %v438 = vpop.f32.mrb[0].mxu0
        %v439 = vadd.f32 0.0, %v438
        %v440 = vpop.f32.mrb[0].mxu0
        %441 = vdwg.mxu0
        %v443 = vsel %vm289, %v287, 0
        %v446 = vsel %vm289, %v274, 0
        %448 = vmatprep.subr.mxu0 0.0
        %449 = vmatpush1.xpose.msra.mxu0 %v446
        %450 = vmatprep.subr.mxu0 0.0
        %451 = vmatpush1.xpose.msra.mxu0 0.0
        %452 = vmatprep.subr.mxu0 0.0
        %453 = vmatpush1.xpose.msra.mxu0 0.0
        %454 = vmatprep.subr.mxu0 0.0
        %455 = vmatpush1.xpose.msra.mxu0 0.0
        %456 = vmatprep.subr.mxu0 0.0
        %457 = vmatpush1.xpose.msra.mxu0 0.0
        %458 = vmatprep.subr.mxu0 0.0
        %459 = vmatpush1.xpose.msra.mxu0 0.0
        %460 = vmatprep.subr.mxu0 0.0
        %461 = vmatpush1.xpose.msra.mxu0 0.0
        %462 = vmatprep.subr.mxu0 0.0
        %463 = vmatpush1.xpose.msra.mxu0 0.0
        %464 = vmatprep.subr.mxu0 0.0
        %465 = vmatpush1.xpose.msra.mxu0 0.0
        %466 = vmatprep.subr.mxu0 0.0
        %467 = vmatpush1.xpose.msra.mxu0 0.0
        %468 = vmatprep.subr.mxu0 0.0
        %469 = vmatpush1.xpose.msra.mxu0 0.0
        %470 = vmatprep.subr.mxu0 0.0
        %471 = vmatpush1.xpose.msra.mxu0 0.0
        %472 = vmatprep.subr.mxu0 0.0
        %473 = vmatpush1.xpose.msra.mxu0 0.0
        %474 = vmatprep.subr.mxu0 0.0
        %475 = vmatpush1.xpose.msra.mxu0 0.0
        %476 = vmatprep.subr.mxu0 0.0
        %477 = vmatpush1.xpose.msra.mxu0 0.0
        %478 = vmatprep.subr.mxu0 0.0
        %479 = vmatpush1.xpose.msra.mxu0 0.0
        %480 = vmatprep.subr.mxu0 0.0
        %481 = vmatpush1.xpose.msra.mxu0 0.0
        %482 = vmatprep.subr.mxu0 0.0
        %483 = vmatpush1.xpose.msra.mxu0 0.0
        %484 = vmatprep.subr.mxu0 0.0
        %485 = vmatpush1.xpose.msra.mxu0 0.0
        %486 = vmatprep.subr.mxu0 0.0
        %487 = vmatpush1.xpose.msra.mxu0 0.0
        %488 = vmatprep.subr.mxu0 0.0
        %489 = vmatpush1.xpose.msra.mxu0 0.0
        %490 = vmatprep.subr.mxu0 0.0
        %491 = vmatpush1.xpose.msra.mxu0 0.0
        %492 = vmatprep.subr.mxu0 0.0
        %493 = vmatpush1.xpose.msra.mxu0 0.0
        %494 = vmatprep.subr.mxu0 0.0
        %495 = vmatpush1.xpose.msra.mxu0 0.0
        %496 = vmatprep.subr.mxu0 0.0
        %497 = vmatpush1.xpose.msra.mxu0 0.0
        %498 = vmatprep.subr.mxu0 0.0
        %499 = vmatpush1.xpose.msra.mxu0 0.0
        %500 = vmatprep.subr.mxu0 0.0
        %501 = vmatpush1.xpose.msra.mxu0 0.0
        %502 = vmatprep.subr.mxu0 0.0
        %503 = vmatpush1.xpose.msra.mxu0 0.0
        %504 = vmatprep.subr.mxu0 0.0
        %505 = vmatpush1.xpose.msra.mxu0 0.0
        %506 = vmatprep.subr.mxu0 0.0
        %507 = vmatpush1.xpose.msra.mxu0 0.0
        %508 = vmatprep.subr.mxu0 0.0
        %509 = vmatpush1.xpose.msra.mxu0 0.0
        %510 = vmatprep.subr.mxu0 0.0
        %511 = vmatpush1.xpose.msra.mxu0 0.0
        %512 = vmatprep.mubr.f32.mxu0 0.0
        %513 = vmatmul.mubr.f32.gmra.mrb[0].mxu0 %v443
        %v514 = vpop.f32.mrb[0].mxu0
        %v515 = vadd.f32 0.0, %v514
        %v516 = vpop.f32.mrb[0].mxu0
        %517 = vdwg.mxu0
        %v519 = vsel %vm289, %v288, 0
        %v522 = vsel %vm289, %v275, 0
        %524 = vmatprep.subr.mxu0 0.0
        %525 = vmatpush1.xpose.msra.mxu0 %v522
        %526 = vmatprep.subr.mxu0 0.0
        %527 = vmatpush1.xpose.msra.mxu0 0.0
        %528 = vmatprep.subr.mxu0 0.0
        %529 = vmatpush1.xpose.msra.mxu0 0.0
        %530 = vmatprep.subr.mxu0 0.0
        %531 = vmatpush1.xpose.msra.mxu0 0.0
        %532 = vmatprep.subr.mxu0 0.0
        %533 = vmatpush1.xpose.msra.mxu0 0.0
        %534 = vmatprep.subr.mxu0 0.0
        %535 = vmatpush1.xpose.msra.mxu0 0.0
        %536 = vmatprep.subr.mxu0 0.0
        %537 = vmatpush1.xpose.msra.mxu0 0.0
        %538 = vmatprep.subr.mxu0 0.0
        %539 = vmatpush1.xpose.msra.mxu0 0.0
        %540 = vmatprep.subr.mxu0 0.0
        %541 = vmatpush1.xpose.msra.mxu0 0.0
        %542 = vmatprep.subr.mxu0 0.0
        %543 = vmatpush1.xpose.msra.mxu0 0.0
        %544 = vmatprep.subr.mxu0 0.0
        %545 = vmatpush1.xpose.msra.mxu0 0.0
        %546 = vmatprep.subr.mxu0 0.0
        %547 = vmatpush1.xpose.msra.mxu0 0.0
        %548 = vmatprep.subr.mxu0 0.0
        %549 = vmatpush1.xpose.msra.mxu0 0.0
        %550 = vmatprep.subr.mxu0 0.0
        %551 = vmatpush1.xpose.msra.mxu0 0.0
        %552 = vmatprep.subr.mxu0 0.0
        %553 = vmatpush1.xpose.msra.mxu0 0.0
        %554 = vmatprep.subr.mxu0 0.0
        %555 = vmatpush1.xpose.msra.mxu0 0.0
        %556 = vmatprep.subr.mxu0 0.0
        %557 = vmatpush1.xpose.msra.mxu0 0.0
        %558 = vmatprep.subr.mxu0 0.0
        %559 = vmatpush1.xpose.msra.mxu0 0.0
        %560 = vmatprep.subr.mxu0 0.0
        %561 = vmatpush1.xpose.msra.mxu0 0.0
        %562 = vmatprep.subr.mxu0 0.0
        %563 = vmatpush1.xpose.msra.mxu0 0.0
        %564 = vmatprep.subr.mxu0 0.0
        %565 = vmatpush1.xpose.msra.mxu0 0.0
        %566 = vmatprep.subr.mxu0 0.0
        %567 = vmatpush1.xpose.msra.mxu0 0.0
        %568 = vmatprep.subr.mxu0 0.0
        %569 = vmatpush1.xpose.msra.mxu0 0.0
        %570 = vmatprep.subr.mxu0 0.0
        %571 = vmatpush1.xpose.msra.mxu0 0.0
        %572 = vmatprep.subr.mxu0 0.0
        %573 = vmatpush1.xpose.msra.mxu0 0.0
        %574 = vmatprep.subr.mxu0 0.0
        %575 = vmatpush1.xpose.msra.mxu0 0.0
        %576 = vmatprep.subr.mxu0 0.0
        %577 = vmatpush1.xpose.msra.mxu0 0.0
        %578 = vmatprep.subr.mxu0 0.0
        %579 = vmatpush1.xpose.msra.mxu0 0.0
        %580 = vmatprep.subr.mxu0 0.0
        %581 = vmatpush1.xpose.msra.mxu0 0.0
        %582 = vmatprep.subr.mxu0 0.0
        %583 = vmatpush1.xpose.msra.mxu0 0.0
        %584 = vmatprep.subr.mxu0 0.0
        %585 = vmatpush1.xpose.msra.mxu0 0.0
        %586 = vmatprep.subr.mxu0 0.0
        %587 = vmatpush1.xpose.msra.mxu0 0.0
        %588 = vmatprep.mubr.f32.mxu0 0.0
        %589 = vmatmul.mubr.f32.gmra.mrb[0].mxu0 %v519
        %v590 = vpop.f32.mrb[0].mxu0
        %v591 = vadd.f32 0.0, %v590
        %v592 = vpop.f32.mrb[0].mxu0
        %593 = vdwg.mxu0
        %vm594 = vcmask 64512
        %v595 = vsel %vm594, %v363, -inf
        %596 = vmax.xlane.f32.xlu0 %v595
        %v597 = vpop.xlane.xlu0 %596
        %v598 = vsel %vm594, %v439, -inf
        %599 = vmax.xlane.f32.xlu0 %v598
        %v600 = vpop.xlane.xlu0 %599
        %v601 = vsel %vm594, %v515, -inf
        %602 = vmax.xlane.f32.xlu0 %v601
        %v603 = vpop.xlane.xlu0 %602
        %v604 = vsel %vm594, %v591, -inf
        %605 = vmax.xlane.f32.xlu0 %v604
        %v606 = vpop.xlane.xlu0 %605
        %v607 = vsub.f32 %v363, %v597
        %v608 = vsub.f32 %v439, %v600
        %v609 = vsub.f32 %v515, %v603
        %v610 = vsub.f32 %v591, %v606
        %v611 = vmul.f32 %v607, 1.442695
        %v612 = vpow.pop %v611
        %v613 = vmul.f32 %v608, 1.442695
        %v614 = vpow.pop %v613
        %v615 = vmul.f32 %v609, 1.442695
        %v616 = vpow.pop %v615
        %v617 = vmul.f32 %v610, 1.442695
        %v618 = vpow.pop %v617
        %v619 = vsel %vm594, %v612, 0.0
        %620 = vadd.xlane.f32.xlu0 %v619
        %v621 = vpop.xlane.xlu0 %620
        %v622 = vsel %vm594, %v614, 0.0
        %623 = vadd.xlane.f32.xlu0 %v622
        %v624 = vpop.xlane.xlu0 %623
        %v625 = vsel %vm594, %v616, 0.0
        %626 = vadd.xlane.f32.xlu0 %v625
        %v627 = vpop.xlane.xlu0 %626
        %v628 = vsel %vm594, %v618, 0.0
        %629 = vadd.xlane.f32.xlu0 %v628
        %v630 = vpop.xlane.xlu0 %629
        %v631 = vrcp.pop %v621
        %v632 = vrcp.pop %v624
        %v633 = vrcp.pop %v627
        %v634 = vrcp.pop %v630
        %v635 = vmul.f32 %v612, %v631
        %v636 = vmul.f32 %v614, %v632
        %v637 = vmul.f32 %v616, %v633
        %v638 = vmul.f32 %v618, %v634
        %v640 = vsel %vm594, %v635, 0
        %642 = vmatprep.subr.mxu0 0.0
        %643 = vmatpush1.msra.mxu0 %v276
        %644 = vmatprep.subr.mxu0 0.0
        %645 = vmatpush1.msra.mxu0 0.0
        %646 = vmatprep.subr.mxu0 0.0
        %647 = vmatpush1.msra.mxu0 0.0
        %648 = vmatprep.subr.mxu0 0.0
        %649 = vmatpush1.msra.mxu0 0.0
        %650 = vmatprep.subr.mxu0 0.0
        %651 = vmatpush1.msra.mxu0 0.0
        %652 = vmatprep.subr.mxu0 0.0
        %653 = vmatpush1.msra.mxu0 0.0
        %654 = vmatprep.subr.mxu0 0.0
        %655 = vmatpush1.msra.mxu0 0.0
        %656 = vmatprep.subr.mxu0 0.0
        %657 = vmatpush1.msra.mxu0 0.0
        %658 = vmatprep.subr.mxu0 0.0
        %659 = vmatpush1.msra.mxu0 0.0
        %660 = vmatprep.subr.mxu0 0.0
        %661 = vmatpush1.msra.mxu0 0.0
        %662 = vmatprep.subr.mxu0 0.0
        %663 = vmatpush1.msra.mxu0 0.0
        %664 = vmatprep.subr.mxu0 0.0
        %665 = vmatpush1.msra.mxu0 0.0
        %666 = vmatprep.subr.mxu0 0.0
        %667 = vmatpush1.msra.mxu0 0.0
        %668 = vmatprep.subr.mxu0 0.0
        %669 = vmatpush1.msra.mxu0 0.0
        %670 = vmatprep.subr.mxu0 0.0
        %671 = vmatpush1.msra.mxu0 0.0
        %672 = vmatprep.subr.mxu0 0.0
        %673 = vmatpush1.msra.mxu0 0.0
        %674 = vmatprep.subr.mxu0 0.0
        %675 = vmatpush1.msra.mxu0 0.0
        %676 = vmatprep.subr.mxu0 0.0
        %677 = vmatpush1.msra.mxu0 0.0
        %678 = vmatprep.subr.mxu0 0.0
        %679 = vmatpush1.msra.mxu0 0.0
        %680 = vmatprep.subr.mxu0 0.0
        %681 = vmatpush1.msra.mxu0 0.0
        %682 = vmatprep.subr.mxu0 0.0
        %683 = vmatpush1.msra.mxu0 0.0
        %684 = vmatprep.subr.mxu0 0.0
        %685 = vmatpush1.msra.mxu0 0.0
        %686 = vmatprep.subr.mxu0 0.0
        %687 = vmatpush1.msra.mxu0 0.0
        %688 = vmatprep.subr.mxu0 0.0
        %689 = vmatpush1.msra.mxu0 0.0
        %690 = vmatprep.subr.mxu0 0.0
        %691 = vmatpush1.msra.mxu0 0.0
        %692 = vmatprep.subr.mxu0 0.0
        %693 = vmatpush1.msra.mxu0 0.0
        %694 = vmatprep.subr.mxu0 0.0
        %695 = vmatpush1.msra.mxu0 0.0
        %696 = vmatprep.subr.mxu0 0.0
        %697 = vmatpush1.msra.mxu0 0.0
        %698 = vmatprep.subr.mxu0 0.0
        %699 = vmatpush1.msra.mxu0 0.0
        %700 = vmatprep.subr.mxu0 0.0
        %701 = vmatpush1.msra.mxu0 0.0
        %702 = vmatprep.subr.mxu0 0.0
        %703 = vmatpush1.msra.mxu0 0.0
        %704 = vmatprep.subr.mxu0 0.0
        %705 = vmatpush1.msra.mxu0 0.0
        %706 = vmatprep.mubr.f32.mxu0 0.0
        %707 = vmatmul.mubr.f32.gmra.mrb[0].mxu0 %v640
        %v708 = vpop.f32.mrb[0].mxu0
        %v709 = vadd.f32 0.0, %v708
        %v710 = vpop.f32.mrb[0].mxu0
        %711 = vdwg.mxu0
        %v713 = vsel %vm594, %v636, 0
        %715 = vmatprep.subr.mxu0 0.0
        %716 = vmatpush1.msra.mxu0 %v277
        %717 = vmatprep.subr.mxu0 0.0
        %718 = vmatpush1.msra.mxu0 0.0
        %719 = vmatprep.subr.mxu0 0.0
        %720 = vmatpush1.msra.mxu0 0.0
        %721 = vmatprep.subr.mxu0 0.0
        %722 = vmatpush1.msra.mxu0 0.0
        %723 = vmatprep.subr.mxu0 0.0
        %724 = vmatpush1.msra.mxu0 0.0
        %725 = vmatprep.subr.mxu0 0.0
        %726 = vmatpush1.msra.mxu0 0.0
        %727 = vmatprep.subr.mxu0 0.0
        %728 = vmatpush1.msra.mxu0 0.0
        %729 = vmatprep.subr.mxu0 0.0
        %730 = vmatpush1.msra.mxu0 0.0
        %731 = vmatprep.subr.mxu0 0.0
        %732 = vmatpush1.msra.mxu0 0.0
        %733 = vmatprep.subr.mxu0 0.0
        %734 = vmatpush1.msra.mxu0 0.0
        %735 = vmatprep.subr.mxu0 0.0
        %736 = vmatpush1.msra.mxu0 0.0
        %737 = vmatprep.subr.mxu0 0.0
        %738 = vmatpush1.msra.mxu0 0.0
        %739 = vmatprep.subr.mxu0 0.0
        %740 = vmatpush1.msra.mxu0 0.0
        %741 = vmatprep.subr.mxu0 0.0
        %742 = vmatpush1.msra.mxu0 0.0
        %743 = vmatprep.subr.mxu0 0.0
        %744 = vmatpush1.msra.mxu0 0.0
        %745 = vmatprep.subr.mxu0 0.0
        %746 = vmatpush1.msra.mxu0 0.0
        %747 = vmatprep.subr.mxu0 0.0
        %748 = vmatpush1.msra.mxu0 0.0
        %749 = vmatprep.subr.mxu0 0.0
        %750 = vmatpush1.msra.mxu0 0.0
        %751 = vmatprep.subr.mxu0 0.0
        %752 = vmatpush1.msra.mxu0 0.0
        %753 = vmatprep.subr.mxu0 0.0
        %754 = vmatpush1.msra.mxu0 0.0
        %755 = vmatprep.subr.mxu0 0.0
        %756 = vmatpush1.msra.mxu0 0.0
        %757 = vmatprep.subr.mxu0 0.0
        %758 = vmatpush1.msra.mxu0 0.0
        %759 = vmatprep.subr.mxu0 0.0
        %760 = vmatpush1.msra.mxu0 0.0
        %761 = vmatprep.subr.mxu0 0.0
        %762 = vmatpush1.msra.mxu0 0.0
        %763 = vmatprep.subr.mxu0 0.0
        %764 = vmatpush1.msra.mxu0 0.0
        %765 = vmatprep.subr.mxu0 0.0
        %766 = vmatpush1.msra.mxu0 0.0
        %767 = vmatprep.subr.mxu0 0.0
        %768 = vmatpush1.msra.mxu0 0.0
        %769 = vmatprep.subr.mxu0 0.0
        %770 = vmatpush1.msra.mxu0 0.0
        %771 = vmatprep.subr.mxu0 0.0
        %772 = vmatpush1.msra.mxu0 0.0
        %773 = vmatprep.subr.mxu0 0.0
        %774 = vmatpush1.msra.mxu0 0.0
        %775 = vmatprep.subr.mxu0 0.0
        %776 = vmatpush1.msra.mxu0 0.0
        %777 = vmatprep.subr.mxu0 0.0
        %778 = vmatpush1.msra.mxu0 0.0
        %779 = vmatprep.mubr.f32.mxu0 0.0
        %780 = vmatmul.mubr.f32.gmra.mrb[0].mxu0 %v713
        %v781 = vpop.f32.mrb[0].mxu0
        %v782 = vadd.f32 0.0, %v781
        %v783 = vpop.f32.mrb[0].mxu0
        %784 = vdwg.mxu0
        %v786 = vsel %vm594, %v637, 0
        %788 = vmatprep.subr.mxu0 0.0
        %789 = vmatpush1.msra.mxu0 %v278
        %790 = vmatprep.subr.mxu0 0.0
        %791 = vmatpush1.msra.mxu0 0.0
        %792 = vmatprep.subr.mxu0 0.0
        %793 = vmatpush1.msra.mxu0 0.0
        %794 = vmatprep.subr.mxu0 0.0
        %795 = vmatpush1.msra.mxu0 0.0
        %796 = vmatprep.subr.mxu0 0.0
        %797 = vmatpush1.msra.mxu0 0.0
        %798 = vmatprep.subr.mxu0 0.0
        %799 = vmatpush1.msra.mxu0 0.0
        %800 = vmatprep.subr.mxu0 0.0
        %801 = vmatpush1.msra.mxu0 0.0
        %802 = vmatprep.subr.mxu0 0.0
        %803 = vmatpush1.msra.mxu0 0.0
        %804 = vmatprep.subr.mxu0 0.0
        %805 = vmatpush1.msra.mxu0 0.0
        %806 = vmatprep.subr.mxu0 0.0
        %807 = vmatpush1.msra.mxu0 0.0
        %808 = vmatprep.subr.mxu0 0.0
        %809 = vmatpush1.msra.mxu0 0.0
        %810 = vmatprep.subr.mxu0 0.0
        %811 = vmatpush1.msra.mxu0 0.0
        %812 = vmatprep.subr.mxu0 0.0
        %813 = vmatpush1.msra.mxu0 0.0
        %814 = vmatprep.subr.mxu0 0.0
        %815 = vmatpush1.msra.mxu0 0.0
        %816 = vmatprep.subr.mxu0 0.0
        %817 = vmatpush1.msra.mxu0 0.0
        %818 = vmatprep.subr.mxu0 0.0
        %819 = vmatpush1.msra.mxu0 0.0
        %820 = vmatprep.subr.mxu0 0.0
        %821 = vmatpush1.msra.mxu0 0.0
        %822 = vmatprep.subr.mxu0 0.0
        %823 = vmatpush1.msra.mxu0 0.0
        %824 = vmatprep.subr.mxu0 0.0
        %825 = vmatpush1.msra.mxu0 0.0
        %826 = vmatprep.subr.mxu0 0.0
        %827 = vmatpush1.msra.mxu0 0.0
        %828 = vmatprep.subr.mxu0 0.0
        %829 = vmatpush1.msra.mxu0 0.0
        %830 = vmatprep.subr.mxu0 0.0
        %831 = vmatpush1.msra.mxu0 0.0
        %832 = vmatprep.subr.mxu0 0.0
        %833 = vmatpush1.msra.mxu0 0.0
        %834 = vmatprep.subr.mxu0 0.0
        %835 = vmatpush1.msra.mxu0 0.0
        %836 = vmatprep.subr.mxu0 0.0
        %837 = vmatpush1.msra.mxu0 0.0
        %838 = vmatprep.subr.mxu0 0.0
        %839 = vmatpush1.msra.mxu0 0.0
        %840 = vmatprep.subr.mxu0 0.0
        %841 = vmatpush1.msra.mxu0 0.0
        %842 = vmatprep.subr.mxu0 0.0
        %843 = vmatpush1.msra.mxu0 0.0
        %844 = vmatprep.subr.mxu0 0.0
        %845 = vmatpush1.msra.mxu0 0.0
        %846 = vmatprep.subr.mxu0 0.0
        %847 = vmatpush1.msra.mxu0 0.0
        %848 = vmatprep.subr.mxu0 0.0
        %849 = vmatpush1.msra.mxu0 0.0
        %850 = vmatprep.subr.mxu0 0.0
        %851 = vmatpush1.msra.mxu0 0.0
        %852 = vmatprep.mubr.f32.mxu0 0.0
        %853 = vmatmul.mubr.f32.gmra.mrb[0].mxu0 %v786
        %v854 = vpop.f32.mrb[0].mxu0
        %v855 = vadd.f32 0.0, %v854
        %v856 = vpop.f32.mrb[0].mxu0
        %857 = vdwg.mxu0
        %v859 = vsel %vm594, %v638, 0
        %861 = vmatprep.subr.mxu0 0.0
        %862 = vmatpush1.msra.mxu0 %v279
        %863 = vmatprep.subr.mxu0 0.0
        %864 = vmatpush1.msra.mxu0 0.0
        %865 = vmatprep.subr.mxu0 0.0
        %866 = vmatpush1.msra.mxu0 0.0
        %867 = vmatprep.subr.mxu0 0.0
        %868 = vmatpush1.msra.mxu0 0.0
        %869 = vmatprep.subr.mxu0 0.0
        %870 = vmatpush1.msra.mxu0 0.0
        %871 = vmatprep.subr.mxu0 0.0
        %872 = vmatpush1.msra.mxu0 0.0
        %873 = vmatprep.subr.mxu0 0.0
        %874 = vmatpush1.msra.mxu0 0.0
        %875 = vmatprep.subr.mxu0 0.0
        %876 = vmatpush1.msra.mxu0 0.0
        %877 = vmatprep.subr.mxu0 0.0
        %878 = vmatpush1.msra.mxu0 0.0
        %879 = vmatprep.subr.mxu0 0.0
        %880 = vmatpush1.msra.mxu0 0.0
        %881 = vmatprep.subr.mxu0 0.0
        %882 = vmatpush1.msra.mxu0 0.0
        %883 = vmatprep.subr.mxu0 0.0
        %884 = vmatpush1.msra.mxu0 0.0
        %885 = vmatprep.subr.mxu0 0.0
        %886 = vmatpush1.msra.mxu0 0.0
        %887 = vmatprep.subr.mxu0 0.0
        %888 = vmatpush1.msra.mxu0 0.0
        %889 = vmatprep.subr.mxu0 0.0
        %890 = vmatpush1.msra.mxu0 0.0
        %891 = vmatprep.subr.mxu0 0.0
        %892 = vmatpush1.msra.mxu0 0.0
        %893 = vmatprep.subr.mxu0 0.0
        %894 = vmatpush1.msra.mxu0 0.0
        %895 = vmatprep.subr.mxu0 0.0
        %896 = vmatpush1.msra.mxu0 0.0
        %897 = vmatprep.subr.mxu0 0.0
        %898 = vmatpush1.msra.mxu0 0.0
        %899 = vmatprep.subr.mxu0 0.0
        %900 = vmatpush1.msra.mxu0 0.0
        %901 = vmatprep.subr.mxu0 0.0
        %902 = vmatpush1.msra.mxu0 0.0
        %903 = vmatprep.subr.mxu0 0.0
        %904 = vmatpush1.msra.mxu0 0.0
        %905 = vmatprep.subr.mxu0 0.0
        %906 = vmatpush1.msra.mxu0 0.0
        %907 = vmatprep.subr.mxu0 0.0
        %908 = vmatpush1.msra.mxu0 0.0
        %909 = vmatprep.subr.mxu0 0.0
        %910 = vmatpush1.msra.mxu0 0.0
        %911 = vmatprep.subr.mxu0 0.0
        %912 = vmatpush1.msra.mxu0 0.0
        %913 = vmatprep.subr.mxu0 0.0
        %914 = vmatpush1.msra.mxu0 0.0
        %915 = vmatprep.subr.mxu0 0.0
        %916 = vmatpush1.msra.mxu0 0.0
        %917 = vmatprep.subr.mxu0 0.0
        %918 = vmatpush1.msra.mxu0 0.0
        %919 = vmatprep.subr.mxu0 0.0
        %920 = vmatpush1.msra.mxu0 0.0
        %921 = vmatprep.subr.mxu0 0.0
        %922 = vmatpush1.msra.mxu0 0.0
        %923 = vmatprep.subr.mxu0 0.0
        %924 = vmatpush1.msra.mxu0 0.0
        %925 = vmatprep.mubr.f32.mxu0 0.0
        %926 = vmatmul.mubr.f32.gmra.mrb[0].mxu0 %v859
        %v927 = vpop.f32.mrb[0].mxu0
        %v928 = vadd.f32 0.0, %v927
        %v929 = vpop.f32.mrb[0].mxu0
        %930 = vdwg.mxu0
        %931 = vst.msk [vmem:[%s267] sm:$0xff] %vm289, %v709
        %932 = vst.msk [vmem:[%s267 + $0x8] sm:$0xff] %vm289, %v782
        %933 = vst.msk [vmem:[%s267 + $0x10] sm:$0xff] %vm289, %v855
        %934 = vst.msk [vmem:[%s267 + $0x18] sm:$0xff] %vm289, %v928
        %s935 = sand.u32 %s111, 1
        %s936 = scalar_lea.sflag [#allocation6], %s935
        %s937 = sand.u32 %s111, 1
        %s938 = smul.addr %s937, 32
        %s939 = scalar_lea.vmem [#allocation10], %s938
        // Predicated region
        $region45: #{tpu_custom_call.1} parent=31 // pred_check
          %p940 = pneg %p121
        $region46: #{tpu_custom_call.1} parent=31 // pred_check_branch
          %942 = sbr.rel (%p940) target = $region48
        $region47: #{tpu_custom_call.1} parent=31 // pred_region
          %s944 = ssub.s32 512, 512
          %945 = vsyncadd %s936, %s944
          %s946 = smul.addr %s25, 4
          %s947 = smul.addr %s946, 128
          %s948 = scalar_lea.hbm %s4, %s947
          %s949 = sshll.u32 %s939, 4
          %s950 = int_to_ptr.vmem [resolvable:$true] %s949
          %955 = dma.vmem_to_hbm [thread:$0]  %s950, 512, %s948, %s936, 128, 128, 8
        $region48: #{tpu_custom_call.1} parent=31 // pred_fallthru
          _
      $region32: #{tpu_custom_call.1} parent=5 // pred_fallthru
        _
      %p956 = scmp.le.s32.totalorder 2, %s20
      // Predicated region
      $region49: #{tpu_custom_call.1} parent=5 // pred_check
        %p957 = pneg %p956
      $region50: #{tpu_custom_call.1} parent=5 // pred_check_branch
        %959 = sbr.rel (%p957) target = $region52
      $region51: #{tpu_custom_call.1} parent=5 // pred_region
        %s960 = ssub.s32 %s20, 2
        // Predicated region
        $region53: #{tpu_custom_call.1} parent=51 // pred_check
          %p961 = pneg %p127
        $region54: #{tpu_custom_call.1} parent=51 // pred_check_branch
          %963 = sbr.rel (%p961) target = $region56
        $region55: #{tpu_custom_call.1} parent=51 // pred_region
          %s964 = sand.u32 %s112, 1
          %s965 = scalar_lea.sflag [#allocation6], %s964
          %s966 = sand.u32 %s112, 1
          %s967 = smul.addr %s966, 32
          %s968 = scalar_lea.vmem [#allocation10], %s967
          %969 = dma.done %s965, 512
        $region56: #{tpu_custom_call.1} parent=51 // pred_fallthru
          _
      $region52: #{tpu_custom_call.1} parent=5 // pred_fallthru
        _
    $region6: #{tpu_custom_call.1} parent=1 // loop_footer
      %s24 = sadd.s32 1, %s20
    $region7: #{tpu_custom_call.1} parent=1 // loop_footer_branch
      %19 = sbr.rel target = $region3
    $region8: #{tpu_custom_call.1} parent=1 // loop_exit
      _
    %970 = vsyncpa [#allocation5], 1
    %s971 = scalar_lea.sflag [#allocation5], 1
    %972 = vsyncpa %s971, 1
    %973 = vsyncpa [#allocation8], 1
    %s974 = scalar_lea.sflag [#allocation8], 1
    %975 = vsyncpa %s974, 1
    %976 = vsyncpa [#allocation6], 1
    %s977 = scalar_lea.sflag [#allocation6], 1
    %978 = vsyncpa %s977, 1

</llo_original>
